<compile_context>
chip_gen: v5e
topology: v5e:2x2
jax: 0.10.0
libtpu: 0.0.40
codegen_flags: <defaults>
</compile_context>

<pallas_src>
import jax
import jax.numpy as jnp
from jax.experimental import pallas as pl
from jax.experimental.pallas import tpu as pltpu

BLOCK_SIZE = 120   # T
EMB = 8            # embeddings
B_TILE_CAP = 1024  # max batch rows per grid step (VMEM-safe on v5e/v6e/v7x)


def time2vec_kernel(x_ref, wtl_ref, wtp_ref, plin_ref, pper_ref, out_ref):
    """x_ref: (bt, T); wtl_ref/wtp_ref: (T, T) (pre-transposed W.T);
    plin_ref/pper_ref: (T, T*E) expansion matrices; out_ref: (bt, T*E)."""
    x = x_ref[...]                                                     # (bt, T)
    # Main branches (same contraction as the PyTorch module).
    tl = jnp.dot(x, wtl_ref[...], preferred_element_type=jnp.float32)  # (bt, T)
    # NOTE: sin is a VPU range-reduction polynomial (not EUP), but cheap here.
    tp = jnp.sin(jnp.dot(x, wtp_ref[...],
                         preferred_element_type=jnp.float32))          # (bt, T)
    # Projection as lane-dense matmuls: out[b, t*E+e] = tl[b,t]*Wp[e,0]
    #                                                 + tp[b,t]*Wp[e,1]
    out_ref[...] = (
        jnp.dot(tl, plin_ref[...], preferred_element_type=jnp.float32)
        + jnp.dot(tp, pper_ref[...], preferred_element_type=jnp.float32)
    )                                                                  # (bt, T*E)


def _round_up(a, m):
    return ((a + m - 1) // m) * m


def _choose_b_tile(B, cap=B_TILE_CAP):
    """Batch rows per grid step.  Batch is the SUBLANE dim (lanes are T / T*E),
    so only 8-row granularity is required."""
    bt = _round_up(B, 8)
    if bt <= 256:
        # Single small step; padding waste is at most 7 rows.
        return bt
    # Moderate/large batches: at least two grid steps so the "parallel" axis
    # can shard across both TensorCores on v7x; cap for VMEM headroom
    # (b_tile=1024 -> ~2*1024*(T + T*E)*4B + ~1 MiB weights ~= 9.5 MiB,
    #  inside v5e's 16 MiB default scoped VMEM; v6e/v7x have 32 MiB).
    return min(cap, _round_up((B + 1) // 2, 8))


def time2vector_forward(params, x):
    """params: 'w_lin' (T,T), 'w_per' (T,T), 'w_proj' (E,2) in the PyTorch
    nn.Linear (out_features, in_features) layout.  x: (B, T) -> (B, T, E)."""
    B, T = x.shape
    assert T == BLOCK_SIZE
    E = EMB

    b_tile = _choose_b_tile(B)
    b_pad = _round_up(B, b_tile)

    x_p = x.astype(jnp.float32)
    if b_pad != B:
        x_p = jnp.pad(x_p, ((0, b_pad - B), (0, 0)))                 # (b_pad, T)

    # Wrapper-side weight prep (tiny, constant-shaped):
    #   pre-transposed weights so the kernel does x @ W.T with no in-kernel
    #   transpose, and kron-expansion matrices for the lane-dense projection.
    wT_lin = params["w_lin"].T.astype(jnp.float32)                   # (T, T)
    wT_per = params["w_per"].T.astype(jnp.float32)                   # (T, T)
    wp = params["w_proj"].astype(jnp.float32)                        # (E, 2)
    eye = jnp.eye(T, dtype=jnp.float32)
    p_lin = jnp.kron(eye, wp[:, 0].reshape(1, E))                    # (T, T*E)
    p_per = jnp.kron(eye, wp[:, 1].reshape(1, E))                    # (T, T*E)

    cost = pl.CostEstimate(
        flops=2 * b_pad * T * T * (2 + 2 * E),
        transcendentals=b_pad * T,
        bytes_accessed=4 * (b_pad * T + 2 * T * T + 2 * T * T * E + b_pad * T * E),
    )

    out_flat = pl.pallas_call(
        time2vec_kernel,
        out_shape=jax.ShapeDtypeStruct((b_pad, T * E), jnp.float32),
        grid=(b_pad // b_tile,),
        in_specs=[
            pl.BlockSpec((b_tile, T), lambda i: (i, 0)),
            pl.BlockSpec((T, T), lambda i: (0, 0)),
            pl.BlockSpec((T, T), lambda i: (0, 0)),
            pl.BlockSpec((T, T * E), lambda i: (0, 0)),
            pl.BlockSpec((T, T * E), lambda i: (0, 0)),
        ],
        out_specs=pl.BlockSpec((b_tile, T * E), lambda i: (i, 0)),
        compiler_params=pltpu.CompilerParams(
            dimension_semantics=("parallel",)),
        cost_estimate=cost,
    )(x_p, wT_lin, wT_per, p_lin, p_per)

    out = out_flat[:B] if b_pad != B else out_flat
    # Free row-major reshape (no data movement) to the PyTorch (B, T, E) layout.
    return out.reshape(B, T, E)


def make_params(key):
    k1, k2, k3 = jax.random.split(key, 3)
    return {
        "w_lin": 0.1 * jax.random.normal(k1, (BLOCK_SIZE, BLOCK_SIZE), jnp.float32),
        "w_per": 0.1 * jax.random.normal(k2, (BLOCK_SIZE, BLOCK_SIZE), jnp.float32),
        "w_proj": 0.1 * jax.random.normal(k3, (EMB, 2), jnp.float32),
    }


def reference_forward(params, x):
    """Pure-JAX reference mirroring the PyTorch Time2Vector.forward."""
    hp = jax.lax.Precision.HIGHEST
    x = x.astype(jnp.float32)
    tl = jnp.dot(x, params["w_lin"].T, precision=hp)            # (B, T)
    tp = jnp.sin(jnp.dot(x, params["w_per"].T, precision=hp))   # (B, T)
    cat = jnp.stack([tl, tp], axis=-1)                          # (B, T, 2)
    return jnp.dot(cat, params["w_proj"].T, precision=hp)       # (B, T, E)


if __name__ == "__main__":
    key = jax.random.PRNGKey(0)
    pkey, xkey = jax.random.split(key)
    params = make_params(pkey)

    B = 2
    x = jax.random.normal(xkey, (B, BLOCK_SIZE), dtype=jnp.float32)

    out = jax.jit(time2vector_forward)(params, x)
    out = jax.block_until_ready(out)
    ref = reference_forward(params, x)

    assert out.shape == (B, BLOCK_SIZE, EMB)
    assert bool(jnp.all(jnp.isfinite(out)))
    assert bool(jnp.allclose(out, ref, atol=1e-3, rtol=1e-3))
    print("KERNEL_OK")
</pallas_src>

<mosaic_0001>
module attributes {stable_mosaic.version = 11 : i64} {
  func.func @time2vec_kernel(%arg0: i32, %arg1: memref<8x120xf32, #tpu.memory_space<vmem>>, %arg2: memref<120x120xf32, #tpu.memory_space<vmem>>, %arg3: memref<120x120xf32, #tpu.memory_space<vmem>>, %arg4: memref<120x960xf32, #tpu.memory_space<vmem>>, %arg5: memref<120x960xf32, #tpu.memory_space<vmem>>, %arg6: memref<8x960xf32, #tpu.memory_space<vmem>>) attributes {dimension_semantics = [#tpu.dimension_semantics<parallel>], iteration_bounds = array<i64: 1>, scalar_prefetch = 0 : i64, scratch_operands = 0 : i64, tpu.core_type = #tpu.core_type<tc>, window_params = [{transform_indices = @transform_0, window_bounds = array<i64: 8, 120>}, {pipeline_mode = #tpu.pipeline_mode<synchronous>, transform_indices = @transform_1, window_bounds = array<i64: 120, 120>}, {pipeline_mode = #tpu.pipeline_mode<synchronous>, transform_indices = @transform_2, window_bounds = array<i64: 120, 120>}, {pipeline_mode = #tpu.pipeline_mode<synchronous>, transform_indices = @transform_3, window_bounds = array<i64: 120, 960>}, {pipeline_mode = #tpu.pipeline_mode<synchronous>, transform_indices = @transform_4, window_bounds = array<i64: 120, 960>}, {transform_indices = @transform_5, window_bounds = array<i64: 8, 960>}]} {
    %c0 = arith.constant 0 : index
    %c0_0 = arith.constant 0 : index
    %0 = vector.load %arg1[%c0, %c0_0] : memref<8x120xf32, #tpu.memory_space<vmem>>, vector<8x120xf32>
    %c0_1 = arith.constant 0 : index
    %c0_2 = arith.constant 0 : index
    %1 = vector.load %arg2[%c0_1, %c0_2] : memref<120x120xf32, #tpu.memory_space<vmem>>, vector<120x120xf32>
    %cst = arith.constant dense<0.000000e+00> : vector<8x120xf32>
    %2 = tpu.matmul %0, %1, %cst {dimension_numbers = #tpu.dot_dimension_numbers<[1], [0], [0], [1], [0, 0, 1, 1], [], []>} : vector<8x120xf32>, vector<120x120xf32>, vector<8x120xf32> -> vector<8x120xf32>
    %c0_3 = arith.constant 0 : index
    %c0_4 = arith.constant 0 : index
    %3 = vector.load %arg3[%c0_3, %c0_4] : memref<120x120xf32, #tpu.memory_space<vmem>>, vector<120x120xf32>
    %cst_5 = arith.constant dense<0.000000e+00> : vector<8x120xf32>
    %4 = tpu.matmul %0, %3, %cst_5 {dimension_numbers = #tpu.dot_dimension_numbers<[1], [0], [0], [1], [0, 0, 1, 1], [], []>} : vector<8x120xf32>, vector<120x120xf32>, vector<8x120xf32> -> vector<8x120xf32>
    %5 = math.sin %4 : vector<8x120xf32>
    %c0_6 = arith.constant 0 : index
    %c0_7 = arith.constant 0 : index
    %6 = vector.load %arg4[%c0_6, %c0_7] : memref<120x960xf32, #tpu.memory_space<vmem>>, vector<120x960xf32>
    %cst_8 = arith.constant dense<0.000000e+00> : vector<8x960xf32>
    %7 = tpu.matmul %2, %6, %cst_8 {dimension_numbers = #tpu.dot_dimension_numbers<[1], [0], [0], [1], [0, 0, 1, 1], [], []>} : vector<8x120xf32>, vector<120x960xf32>, vector<8x960xf32> -> vector<8x960xf32>
    %c0_9 = arith.constant 0 : index
    %c0_10 = arith.constant 0 : index
    %8 = vector.load %arg5[%c0_9, %c0_10] : memref<120x960xf32, #tpu.memory_space<vmem>>, vector<120x960xf32>
    %cst_11 = arith.constant dense<0.000000e+00> : vector<8x960xf32>
    %9 = tpu.matmul %5, %8, %cst_11 {dimension_numbers = #tpu.dot_dimension_numbers<[1], [0], [0], [1], [0, 0, 1, 1], [], []>} : vector<8x120xf32>, vector<120x960xf32>, vector<8x960xf32> -> vector<8x960xf32>
    %10 = arith.addf %7, %9 : vector<8x960xf32>
    %c0_12 = arith.constant 0 : index
    %c0_13 = arith.constant 0 : index
    %11 = vector.load %arg6[%c0_12, %c0_13] : memref<8x960xf32, #tpu.memory_space<vmem>>, vector<8x960xf32>
    tpu.vector_store %arg6[%c0_12, %c0_13], %10 {strides = array<i32>} : memref<8x960xf32, #tpu.memory_space<vmem>>, vector<8x960xf32>,
    return
  }
  func.func @transform_0(%arg0: i32) -> (i32, i32) {
    %c0_i32 = arith.constant 0 : i32
    %c0_i32_0 = arith.constant 0 : i32
    return %arg0, %c0_i32 : i32, i32
  }
  func.func @transform_1(%arg0: i32) -> (i32, i32) {
    %c0_i32 = arith.constant 0 : i32
    %c0_i32_0 = arith.constant 0 : i32
    %c0_i32_1 = arith.constant 0 : i32
    return %c0_i32, %c0_i32_0 : i32, i32
  }
  func.func @transform_2(%arg0: i32) -> (i32, i32) {
    %c0_i32 = arith.constant 0 : i32
    %c0_i32_0 = arith.constant 0 : i32
    %c0_i32_1 = arith.constant 0 : i32
    return %c0_i32, %c0_i32_0 : i32, i32
  }
  func.func @transform_3(%arg0: i32) -> (i32, i32) {
    %c0_i32 = arith.constant 0 : i32
    %c0_i32_0 = arith.constant 0 : i32
    %c0_i32_1 = arith.constant 0 : i32
    return %c0_i32, %c0_i32_0 : i32, i32
  }
  func.func @transform_4(%arg0: i32) -> (i32, i32) {
    %c0_i32 = arith.constant 0 : i32
    %c0_i32_0 = arith.constant 0 : i32
    %c0_i32_1 = arith.constant 0 : i32
    return %c0_i32, %c0_i32_0 : i32, i32
  }
  func.func @transform_5(%arg0: i32) -> (i32, i32) {
    %c0_i32 = arith.constant 0 : i32
    %c0_i32_0 = arith.constant 0 : i32
    return %arg0, %c0_i32 : i32, i32
  }
}

</mosaic_0001>

<llo_original>
// kernel: time2vector_forward.1
$region0: #{time2vector_forward.1}
  #allocation0 [shape = 'u32[]', space=smem, size = 0x4, offset = 0x4, fixed_abs, tag = 'smem constant byte address 0x4 - core index']
  #allocation1 [shape = 'u32[72,128]{1,0:T(1,128)}', space=vmem, size = 0x9000, scoped, tag = 'internal scratch']
  %s0 = inlined_call_operand.vmem [shape: f32[8,120], index: 0, kind: input, shape index: {}]
  %s1 = inlined_call_operand.vmem [shape: f32[120,120], index: 1, kind: input, shape index: {}]
  %s2 = inlined_call_operand.vmem [shape: f32[120,120], index: 2, kind: input, shape index: {}]
  %s3 = inlined_call_operand.vmem [shape: f32[120,960], index: 3, kind: input, shape index: {}]
  %s4 = inlined_call_operand.vmem [shape: f32[120,960], index: 4, kind: input, shape index: {}]
  %s5 = inlined_call_operand.vmem [shape: f32[8,960], index: 5, kind: output, shape index: {}]
  %s6 = sld [smem:[#allocation0]]
  $region30: #{time2vector_forward.1} parent=0
    _
  %s8 = ssub.s32 1, %s6
  %s9 = scalar_select 0, %s8, %s6
  // Predicated region
  $region2: #{time2vector_forward.1} parent=0 // pred_check
    _
  $region3: #{time2vector_forward.1} parent=0 // pred_check_branch
    %11 = sbr.rel (0) target = $region5
  $region4: #{time2vector_forward.1} parent=0 // pred_region
    _
  $region5: #{time2vector_forward.1} parent=0 // pred_fallthru
    _
  // Predicated region
  $region6: #{time2vector_forward.1} parent=0 // pred_check
    _
  $region7: #{time2vector_forward.1} parent=0 // pred_check_branch
    %13 = sbr.rel (0) target = $region9
  $region8: #{time2vector_forward.1} parent=0 // pred_region
    _
  $region9: #{time2vector_forward.1} parent=0 // pred_fallthru
    _
  // Predicated region
  $region10: #{time2vector_forward.1} parent=0 // pred_check
    _
  $region11: #{time2vector_forward.1} parent=0 // pred_check_branch
    %15 = sbr.rel (0) target = $region13
  $region12: #{time2vector_forward.1} parent=0 // pred_region
    _
  $region13: #{time2vector_forward.1} parent=0 // pred_fallthru
    _
  // Predicated region
  $region14: #{time2vector_forward.1} parent=0 // pred_check
    _
  $region15: #{time2vector_forward.1} parent=0 // pred_check_branch
    %17 = sbr.rel (0) target = $region17
  $region16: #{time2vector_forward.1} parent=0 // pred_region
    _
  $region17: #{time2vector_forward.1} parent=0 // pred_fallthru
    _
  // Predicated region
  $region18: #{time2vector_forward.1} parent=0 // pred_check
    _
  $region19: #{time2vector_forward.1} parent=0 // pred_check_branch
    %19 = sbr.rel (0) target = $region21
  $region20: #{time2vector_forward.1} parent=0 // pred_region
    _
  $region21: #{time2vector_forward.1} parent=0 // pred_fallthru
    _
  %v20 = vld [vmem:[%s0] sm:$0xff]
  %v21 = vld [vmem:[%s1] sm:$0xff]
  %v22 = vld [vmem:[%s1 + $0x8] sm:$0xff]
  %v23 = vld [vmem:[%s1 + $0x10] sm:$0xff]
  %v24 = vld [vmem:[%s1 + $0x18] sm:$0xff]
  %v25 = vld [vmem:[%s1 + $0x20] sm:$0xff]
  %v26 = vld [vmem:[%s1 + $0x28] sm:$0xff]
  %v27 = vld [vmem:[%s1 + $0x30] sm:$0xff]
  %v28 = vld [vmem:[%s1 + $0x38] sm:$0xff]
  %v29 = vld [vmem:[%s1 + $0x40] sm:$0xff]
  %v30 = vld [vmem:[%s1 + $0x48] sm:$0xff]
  %v31 = vld [vmem:[%s1 + $0x50] sm:$0xff]
  %v32 = vld [vmem:[%s1 + $0x58] sm:$0xff]
  %v33 = vld [vmem:[%s1 + $0x60] sm:$0xff]
  %v34 = vld [vmem:[%s1 + $0x68] sm:$0xff]
  %v35 = vld [vmem:[%s1 + $0x70] sm:$0xff]
  %vm36 = vcmask 982016
  %v38 = vsel %vm36, %v20, 0
  %40 = vmatpush.msra.mxu0 0.0
  %41 = vmatpush.msra.mxu0 %v35
  %42 = vmatpush.msra.mxu0 %v34
  %43 = vmatpush.msra.mxu0 %v33
  %44 = vmatpush.msra.mxu0 %v32
  %45 = vmatpush.msra.mxu0 %v31
  %46 = vmatpush.msra.mxu0 %v30
  %47 = vmatpush.msra.mxu0 %v29
  %48 = vmatpush.msra.mxu0 %v28
  %49 = vmatpush.msra.mxu0 %v27
  %50 = vmatpush.msra.mxu0 %v26
  %51 = vmatpush.msra.mxu0 %v25
  %52 = vmatpush.msra.mxu0 %v24
  %53 = vmatpush.msra.mxu0 %v23
  %54 = vmatpush.msra.mxu0 %v22
  %55 = vmatpush.msra.mxu0 %v21
  %56 = vmatmul.f32.gmra.mxu0 %v38
  %v57 = vpop.f32.mrf.mxu0
  %v58 = vadd.f32 0.0, %v57
  %59 = vdwg.mxu0
  %v60 = vld [vmem:[%s2] sm:$0xff]
  %v61 = vld [vmem:[%s2 + $0x8] sm:$0xff]
  %v62 = vld [vmem:[%s2 + $0x10] sm:$0xff]
  %v63 = vld [vmem:[%s2 + $0x18] sm:$0xff]
  %v64 = vld [vmem:[%s2 + $0x20] sm:$0xff]
  %v65 = vld [vmem:[%s2 + $0x28] sm:$0xff]
  %v66 = vld [vmem:[%s2 + $0x30] sm:$0xff]
  %v67 = vld [vmem:[%s2 + $0x38] sm:$0xff]
  %v68 = vld [vmem:[%s2 + $0x40] sm:$0xff]
  %v69 = vld [vmem:[%s2 + $0x48] sm:$0xff]
  %v70 = vld [vmem:[%s2 + $0x50] sm:$0xff]
  %v71 = vld [vmem:[%s2 + $0x58] sm:$0xff]
  %v72 = vld [vmem:[%s2 + $0x60] sm:$0xff]
  %v73 = vld [vmem:[%s2 + $0x68] sm:$0xff]
  %v74 = vld [vmem:[%s2 + $0x70] sm:$0xff]
  %75 = vmatpush.msra.mxu0 0.0
  %76 = vmatpush.msra.mxu0 %v74
  %77 = vmatpush.msra.mxu0 %v73
  %78 = vmatpush.msra.mxu0 %v72
  %79 = vmatpush.msra.mxu0 %v71
  %80 = vmatpush.msra.mxu0 %v70
  %81 = vmatpush.msra.mxu0 %v69
  %82 = vmatpush.msra.mxu0 %v68
  %83 = vmatpush.msra.mxu0 %v67
  %84 = vmatpush.msra.mxu0 %v66
  %85 = vmatpush.msra.mxu0 %v65
  %86 = vmatpush.msra.mxu0 %v64
  %87 = vmatpush.msra.mxu0 %v63
  %88 = vmatpush.msra.mxu0 %v62
  %89 = vmatpush.msra.mxu0 %v61
  %90 = vmatpush.msra.mxu0 %v60
  %91 = vmatmul.f32.gmra.mxu0 %v38
  %v92 = vpop.f32.mrf.mxu0
  %v93 = vadd.f32 0.0, %v92
  %94 = vdwg.mxu0
  %v95 = vand.u32 2147483647, %v93
  %vm96 = vcmp.le.f32.partialorder %v95, 0.7853982
  %vm97 = vcmp.lt.s32.totalorder %v93, 0
  %v98 = vand.u32 %v93, 2139095040
  %v99 = vshrl.u32 %v98, 23
  %v100 = vsub.s32 %v99, 127
  %v101 = vand.u32 2147483647, %v93
  %v102 = vand.u32 %v101, 8388607
  %v103 = vor.u32 %v102, 8388608
  %v104 = vsub.s32 0, %v103
  %v105 = vadd.s32 %v100, 1
  %vm106 = vcmp.gt.s32.totalorder %v105, 0
  %v107 = vsel %vm106, %v105, 0
  %v108 = vshrl.u32 %v107, 5
  %v109 = vand.u32 %v107, 31
  %v110 = vsub.s32 32, %v109
  %v111 = vshrl.u32 683565275, %v110
  %v112 = vshll.u32 683565275, %v109
  %v113 = vshrl.u32 2475754826, %v110
  %v114 = vor.u32 %v112, %v113
  %v115 = vshll.u32 2475754826, %v109
  %v116 = vshrl.u32 2131351028, %v110
  %v117 = vor.u32 %v115, %v116
  %v118 = vshll.u32 2131351028, %v109
  %v119 = vshrl.u32 2102212464, %v110
  %v120 = vor.u32 %v118, %v119
  %v121 = vshll.u32 2102212464, %v109
  %v122 = vshrl.u32 920167782, %v110
  %v123 = vor.u32 %v121, %v122
  %v124 = vshll.u32 920167782, %v109
  %v125 = vshrl.u32 1326507024, %v110
  %v126 = vor.u32 %v124, %v125
  %vm127 = vcmp.lt.s32.totalorder %v108, 1
  %vm128 = vcmp.lt.s32.totalorder %v108, 2
  %vm129 = vcmp.lt.s32.totalorder %v108, 3
  %vm130 = vcmp.lt.s32.totalorder %v108, 4
  %v131 = vsel %vm127, %v111, %v114
  %v132 = vsel %vm130, %v120, 2102212464
  %v133 = vsel %vm129, %v117, %v132
  %v134 = vsel %vm128, %v131, %v133
  %v135 = vsel %vm127, %v114, %v117
  %v136 = vsel %vm130, %v123, 920167782
  %v137 = vsel %vm129, %v120, %v136
  %v138 = vsel %vm128, %v135, %v137
  %v139 = vsel %vm127, %v117, %v120
  %v140 = vsel %vm130, %v126, 1326507024
  %v141 = vsel %vm129, %v123, %v140
  %v142 = vsel %vm128, %v139, %v141
  %v143 = vshll.u32 %v103, 8
  %v144 = vand.u32 %v143, 65535
  %v145 = vshrl.u32 %v143, 16
  %v146 = vand.u32 %v142, 65535
  %v147 = vshrl.u32 %v142, 16
  %v148 = vmul.u32 %v144, %v146
  %v149 = vmul.u32 %v144, %v147
  %v150 = vmul.u32 %v145, %v146
  %v151 = vmul.u32 %v145, %v147
  %v152 = vshll.u32 %v149, 16
  %v153 = vshrl.u32 %v149, 16
  %v154 = vshll.u32 %v150, 16
  %v155 = vshrl.u32 %v150, 16
  %vm156 = vc.u32 %v148, %v152
  %v157 = vsel %vm156, 1, 0
  %v158 = vadd.s32 %v148, %v152
  %v159 = vadd.s32 %v151, %v157
  %vm160 = vc.u32 %v158, %v154
  %v161 = vsel %vm160, 1, 0
  %v162 = vadd.s32 %v158, %v154
  %v163 = vadd.s32 %v159, %v161
  %v164 = vadd.s32 %v163, %v153
  %v165 = vadd.s32 %v164, %v155
  %v166 = vand.u32 %v143, 65535
  %v167 = vshrl.u32 %v143, 16
  %v168 = vand.u32 %v138, 65535
  %v169 = vshrl.u32 %v138, 16
  %v170 = vmul.u32 %v166, %v168
  %v171 = vmul.u32 %v166, %v169
  %v172 = vmul.u32 %v167, %v168
  %v173 = vmul.u32 %v167, %v169
  %v174 = vshll.u32 %v171, 16
  %v175 = vshrl.u32 %v171, 16
  %v176 = vshll.u32 %v172, 16
  %v177 = vshrl.u32 %v172, 16
  %vm178 = vc.u32 %v170, %v174
  %v179 = vsel %vm178, 1, 0
  %v180 = vadd.s32 %v170, %v174
  %v181 = vadd.s32 %v173, %v179
  %vm182 = vc.u32 %v180, %v176
  %v183 = vsel %vm182, 1, 0
  %v184 = vadd.s32 %v180, %v176
  %v185 = vadd.s32 %v181, %v183
  %v186 = vadd.s32 %v185, %v175
  %v187 = vadd.s32 %v186, %v177
  %v188 = vmul.u32 %v143, %v134
  %v189 = vadd.s32 %v165, %v184
  %vm190 = vc.u32 %v165, %v184
  %v191 = vadd.s32 %v187, 1
  %v192 = vsel %vm190, %v191, %v187
  %v193 = vadd.s32 %v188, %v192
  %v194 = vadd.s32 %v193, 536870912
  %v195 = vshrl.u32 %v194, 30
  %v196 = vshll.u32 %v195, 30
  %v197 = vsub.s32 %v193, %v196
  %vm198 = vcmp.lt.s32.totalorder %v197, 0
  %v199 = vsub.s32 0, %v197
  %v200 = vsel %vm198, %v199, %v197
  %v201 = vclz %v200
  %v202 = vsub.s32 %v201, 2
  %vm203 = vcmp.gt.s32.totalorder 0, %v202
  %v204 = vsel %vm203, 0, %v202
  %v205 = vsub.s32 32, %v204
  %v206 = vshll.u32 %v197, %v204
  %v207 = vshrl.u32 %v189, %v205
  %v208 = vor.u32 %v206, %v207
  %v209 = vsub.s32 4294967266, %v204
  %v210 = vadd.s32 %v209, 127
  %v211 = vshll.u32 %v210, 23
  %v212 = vor.u32 4788187, %v211
  %v213 = vand.u32 2147483647, %v212
  %v215 = vcvt.s32.f32 %v208
  %v216 = vmul.f32 %v215, %v213
  %v217 = vxor.u32 %v216, 2147483648
  %v218 = vsel %vm97, %v217, %v216
  %v219 = vsub.s32 4, %v195
  %v220 = vsel %vm97, %v219, %v195
  %v221 = vsel %vm96, %v93, %v218
  %v222 = vsel %vm96, 0, %v220
  %v223 = vmul.f32 %v221, %v221
  %v224 = vmul.f32 %v223, -0.001358992
  %v225 = vadd.f32 %v224, 0.041655596
  %v226 = vmul.f32 %v223, %v225
  %v227 = vadd.f32 %v226, -0.4999988
  %v228 = vmul.f32 %v223, %v227
  %v229 = vadd.f32 1.0, %v228
  %v230 = vmul.f32 %v221, %v221
  %v231 = vmul.f32 %v230, -0.00019511016
  %v232 = vadd.f32 %v231, 0.008332121
  %v233 = vmul.f32 %v230, %v232
  %v234 = vadd.f32 %v233, -0.16666654
  %v235 = vmul.f32 %v230, %v234
  %v236 = vadd.f32 %v235, 1.0
  %v237 = vmul.f32 %v236, %v221
  %vm238 = vweird.f32 %v93
  %v239 = vadd.s32 %v222, 3
  %v240 = vand.u32 %v239, 3
  %vm241 = vcmp.lt.s32.totalorder %v240, 2
  %vm242 = vcmp.eq.s32.totalorder %v240, 0
  %v243 = vxor.u32 %v237, 2147483648
  %v244 = vsel %vm242, %v229, %v243
  %vm245 = vcmp.eq.s32.totalorder %v240, 2
  %v246 = vxor.u32 %v229, 2147483648
  %v247 = vsel %vm245, %v246, %v237
  %v248 = vsel %vm241, %v244, %v247
  %v249 = vsel %vm238, nan, %v248
  %v250 = vld [vmem:[%s3] sm:$0xff]
  %v251 = vld [vmem:[%s3 + $0x8] sm:$0xff]
  %v252 = vld [vmem:[%s3 + $0x10] sm:$0xff]
  %v253 = vld [vmem:[%s3 + $0x18] sm:$0xff]
  %v254 = vld [vmem:[%s3 + $0x20] sm:$0xff]
  %v255 = vld [vmem:[%s3 + $0x28] sm:$0xff]
  %v256 = vld [vmem:[%s3 + $0x30] sm:$0xff]
  %v257 = vld [vmem:[%s3 + $0x38] sm:$0xff]
  %v258 = vld [vmem:[%s3 + $0x40] sm:$0xff]
  %v259 = vld [vmem:[%s3 + $0x48] sm:$0xff]
  %v260 = vld [vmem:[%s3 + $0x50] sm:$0xff]
  %v261 = vld [vmem:[%s3 + $0x58] sm:$0xff]
  %v262 = vld [vmem:[%s3 + $0x60] sm:$0xff]
  %v263 = vld [vmem:[%s3 + $0x68] sm:$0xff]
  %v264 = vld [vmem:[%s3 + $0x70] sm:$0xff]
  %v265 = vld [vmem:[%s3 + $0x78] sm:$0xff]
  %v266 = vld [vmem:[%s3 + $0x80] sm:$0xff]
  %v267 = vld [vmem:[%s3 + $0x88] sm:$0xff]
  %v268 = vld [vmem:[%s3 + $0x90] sm:$0xff]
  %v269 = vld [vmem:[%s3 + $0x98] sm:$0xff]
  %v270 = vld [vmem:[%s3 + $0xa0] sm:$0xff]
  %v271 = vld [vmem:[%s3 + $0xa8] sm:$0xff]
  %v272 = vld [vmem:[%s3 + $0xb0] sm:$0xff]
  %v273 = vld [vmem:[%s3 + $0xb8] sm:$0xff]
  %v274 = vld [vmem:[%s3 + $0xc0] sm:$0xff]
  %v275 = vld [vmem:[%s3 + $0xc8] sm:$0xff]
  %v276 = vld [vmem:[%s3 + $0xd0] sm:$0xff]
  %v277 = vld [vmem:[%s3 + $0xd8] sm:$0xff]
  %v278 = vld [vmem:[%s3 + $0xe0] sm:$0xff]
  %v279 = vld [vmem:[%s3 + $0xe8] sm:$0xff]
  %v280 = vld [vmem:[%s3 + $0xf0] sm:$0xff]
  %v281 = vld [vmem:[%s3 + $0xf8] sm:$0xff]
  %v282 = vld [vmem:[%s3 + $0x100] sm:$0xff]
  %v283 = vld [vmem:[%s3 + $0x108] sm:$0xff]
  %v284 = vld [vmem:[%s3 + $0x110] sm:$0xff]
  %v285 = vld [vmem:[%s3 + $0x118] sm:$0xff]
  %v286 = vld [vmem:[%s3 + $0x120] sm:$0xff]
  %v287 = vld [vmem:[%s3 + $0x128] sm:$0xff]
  %v288 = vld [vmem:[%s3 + $0x130] sm:$0xff]
  %v289 = vld [vmem:[%s3 + $0x138] sm:$0xff]
  %v290 = vld [vmem:[%s3 + $0x140] sm:$0xff]
  %v291 = vld [vmem:[%s3 + $0x148] sm:$0xff]
  %v292 = vld [vmem:[%s3 + $0x150] sm:$0xff]
  %v293 = vld [vmem:[%s3 + $0x158] sm:$0xff]
  %v294 = vld [vmem:[%s3 + $0x160] sm:$0xff]
  %v295 = vld [vmem:[%s3 + $0x168] sm:$0xff]
  %v296 = vld [vmem:[%s3 + $0x170] sm:$0xff]
  %v297 = vld [vmem:[%s3 + $0x178] sm:$0xff]
  %v298 = vld [vmem:[%s3 + $0x180] sm:$0xff]
  %v299 = vld [vmem:[%s3 + $0x188] sm:$0xff]
  %v300 = vld [vmem:[%s3 + $0x190] sm:$0xff]
  %v301 = vld [vmem:[%s3 + $0x198] sm:$0xff]
  %v302 = vld [vmem:[%s3 + $0x1a0] sm:$0xff]
  %v303 = vld [vmem:[%s3 + $0x1a8] sm:$0xff]
  %v304 = vld [vmem:[%s3 + $0x1b0] sm:$0xff]
  %v305 = vld [vmem:[%s3 + $0x1b8] sm:$0xff]
  %v306 = vld [vmem:[%s3 + $0x1c0] sm:$0xff]
  %v307 = vld [vmem:[%s3 + $0x1c8] sm:$0xff]
  %v308 = vld [vmem:[%s3 + $0x1d0] sm:$0xff]
  %v309 = vld [vmem:[%s3 + $0x1d8] sm:$0xff]
  %v310 = vld [vmem:[%s3 + $0x1e0] sm:$0xff]
  %v311 = vld [vmem:[%s3 + $0x1e8] sm:$0xff]
  %v312 = vld [vmem:[%s3 + $0x1f0] sm:$0xff]
  %v313 = vld [vmem:[%s3 + $0x1f8] sm:$0xff]
  %v314 = vld [vmem:[%s3 + $0x200] sm:$0xff]
  %v315 = vld [vmem:[%s3 + $0x208] sm:$0xff]
  %v316 = vld [vmem:[%s3 + $0x210] sm:$0xff]
  %v317 = vld [vmem:[%s3 + $0x218] sm:$0xff]
  %v318 = vld [vmem:[%s3 + $0x220] sm:$0xff]
  %v319 = vld [vmem:[%s3 + $0x228] sm:$0xff]
  %v320 = vld [vmem:[%s3 + $0x230] sm:$0xff]
  %v321 = vld [vmem:[%s3 + $0x238] sm:$0xff]
  %v322 = vld [vmem:[%s3 + $0x240] sm:$0xff]
  %v323 = vld [vmem:[%s3 + $0x248] sm:$0xff]
  %v324 = vld [vmem:[%s3 + $0x250] sm:$0xff]
  %v325 = vld [vmem:[%s3 + $0x258] sm:$0xff]
  %v326 = vld [vmem:[%s3 + $0x260] sm:$0xff]
  %v327 = vld [vmem:[%s3 + $0x268] sm:$0xff]
  %v328 = vld [vmem:[%s3 + $0x270] sm:$0xff]
  %v329 = vld [vmem:[%s3 + $0x278] sm:$0xff]
  %v330 = vld [vmem:[%s3 + $0x280] sm:$0xff]
  %v331 = vld [vmem:[%s3 + $0x288] sm:$0xff]
  %v332 = vld [vmem:[%s3 + $0x290] sm:$0xff]
  %v333 = vld [vmem:[%s3 + $0x298] sm:$0xff]
  %v334 = vld [vmem:[%s3 + $0x2a0] sm:$0xff]
  %v335 = vld [vmem:[%s3 + $0x2a8] sm:$0xff]
  %v336 = vld [vmem:[%s3 + $0x2b0] sm:$0xff]
  %v337 = vld [vmem:[%s3 + $0x2b8] sm:$0xff]
  %v338 = vld [vmem:[%s3 + $0x2c0] sm:$0xff]
  %v339 = vld [vmem:[%s3 + $0x2c8] sm:$0xff]
  %v340 = vld [vmem:[%s3 + $0x2d0] sm:$0xff]
  %v341 = vld [vmem:[%s3 + $0x2d8] sm:$0xff]
  %v342 = vld [vmem:[%s3 + $0x2e0] sm:$0xff]
  %v343 = vld [vmem:[%s3 + $0x2e8] sm:$0xff]
  %v344 = vld [vmem:[%s3 + $0x2f0] sm:$0xff]
  %v345 = vld [vmem:[%s3 + $0x2f8] sm:$0xff]
  %v346 = vld [vmem:[%s3 + $0x300] sm:$0xff]
  %v347 = vld [vmem:[%s3 + $0x308] sm:$0xff]
  %v348 = vld [vmem:[%s3 + $0x310] sm:$0xff]
  %v349 = vld [vmem:[%s3 + $0x318] sm:$0xff]
  %v350 = vld [vmem:[%s3 + $0x320] sm:$0xff]
  %v351 = vld [vmem:[%s3 + $0x328] sm:$0xff]
  %v352 = vld [vmem:[%s3 + $0x330] sm:$0xff]
  %v353 = vld [vmem:[%s3 + $0x338] sm:$0xff]
  %v354 = vld [vmem:[%s3 + $0x340] sm:$0xff]
  %v355 = vld [vmem:[%s3 + $0x348] sm:$0xff]
  %v356 = vld [vmem:[%s3 + $0x350] sm:$0xff]
  %v357 = vld [vmem:[%s3 + $0x358] sm:$0xff]
  %v358 = vld [vmem:[%s3 + $0x360] sm:$0xff]
  %v359 = vld [vmem:[%s3 + $0x368] sm:$0xff]
  %v360 = vld [vmem:[%s3 + $0x370] sm:$0xff]
  %v361 = vld [vmem:[%s3 + $0x378] sm:$0xff]
  %v362 = vld [vmem:[%s3 + $0x380] sm:$0xff]
  %v363 = vld [vmem:[%s3 + $0x388] sm:$0xff]
  %v364 = vld [vmem:[%s3 + $0x390] sm:$0xff]
  %v365 = vld [vmem:[%s3 + $0x398] sm:$0xff]
  %v366 = vld [vmem:[%s3 + $0x3a0] sm:$0xff]
  %v367 = vld [vmem:[%s3 + $0x3a8] sm:$0xff]
  %v368 = vld [vmem:[%s3 + $0x3b0] sm:$0xff]
  %v369 = vld [vmem:[%s3 + $0x3b8] sm:$0xff]
  %v370 = vld [vmem:[%s4] sm:$0xff]
  %v371 = vld [vmem:[%s4 + $0x8] sm:$0xff]
  %v372 = vld [vmem:[%s4 + $0x10] sm:$0xff]
  %v373 = vld [vmem:[%s4 + $0x18] sm:$0xff]
  %v374 = vld [vmem:[%s4 + $0x20] sm:$0xff]
  %v375 = vld [vmem:[%s4 + $0x28] sm:$0xff]
  %v376 = vld [vmem:[%s4 + $0x30] sm:$0xff]
  %v377 = vld [vmem:[%s4 + $0x38] sm:$0xff]
  %v378 = vld [vmem:[%s4 + $0x40] sm:$0xff]
  %v379 = vld [vmem:[%s4 + $0x48] sm:$0xff]
  %v380 = vld [vmem:[%s4 + $0x50] sm:$0xff]
  %v381 = vld [vmem:[%s4 + $0x58] sm:$0xff]
  %v382 = vld [vmem:[%s4 + $0x60] sm:$0xff]
  %v383 = vld [vmem:[%s4 + $0x68] sm:$0xff]
  %v384 = vld [vmem:[%s4 + $0x70] sm:$0xff]
  %v385 = vld [vmem:[%s4 + $0x78] sm:$0xff]
  %v386 = vld [vmem:[%s4 + $0x80] sm:$0xff]
  %v387 = vld [vmem:[%s4 + $0x88] sm:$0xff]
  %v388 = vld [vmem:[%s4 + $0x90] sm:$0xff]
  %v389 = vld [vmem:[%s4 + $0x98] sm:$0xff]
  %v390 = vld [vmem:[%s4 + $0xa0] sm:$0xff]
  %v391 = vld [vmem:[%s4 + $0xa8] sm:$0xff]
  %v392 = vld [vmem:[%s4 + $0xb0] sm:$0xff]
  %v393 = vld [vmem:[%s4 + $0xb8] sm:$0xff]
  %v394 = vld [vmem:[%s4 + $0xc0] sm:$0xff]
  %v395 = vld [vmem:[%s4 + $0xc8] sm:$0xff]
  %v396 = vld [vmem:[%s4 + $0xd0] sm:$0xff]
  %v397 = vld [vmem:[%s4 + $0xd8] sm:$0xff]
  %v398 = vld [vmem:[%s4 + $0xe0] sm:$0xff]
  %v399 = vld [vmem:[%s4 + $0xe8] sm:$0xff]
  %v400 = vld [vmem:[%s4 + $0xf0] sm:$0xff]
  %v401 = vld [vmem:[%s4 + $0xf8] sm:$0xff]
  %v402 = vld [vmem:[%s4 + $0x100] sm:$0xff]
  %v403 = vld [vmem:[%s4 + $0x108] sm:$0xff]
  %v404 = vld [vmem:[%s4 + $0x110] sm:$0xff]
  %v405 = vld [vmem:[%s4 + $0x118] sm:$0xff]
  %v406 = vld [vmem:[%s4 + $0x120] sm:$0xff]
  %v407 = vld [vmem:[%s4 + $0x128] sm:$0xff]
  %v408 = vld [vmem:[%s4 + $0x130] sm:$0xff]
  %v409 = vld [vmem:[%s4 + $0x138] sm:$0xff]
  %v410 = vld [vmem:[%s4 + $0x140] sm:$0xff]
  %v411 = vld [vmem:[%s4 + $0x148] sm:$0xff]
  %v412 = vld [vmem:[%s4 + $0x150] sm:$0xff]
  %v413 = vld [vmem:[%s4 + $0x158] sm:$0xff]
  %v414 = vld [vmem:[%s4 + $0x160] sm:$0xff]
  %v415 = vld [vmem:[%s4 + $0x168] sm:$0xff]
  %v416 = vld [vmem:[%s4 + $0x170] sm:$0xff]
  %v417 = vld [vmem:[%s4 + $0x178] sm:$0xff]
  %v418 = vld [vmem:[%s4 + $0x180] sm:$0xff]
  %v419 = vld [vmem:[%s4 + $0x188] sm:$0xff]
  %v420 = vld [vmem:[%s4 + $0x190] sm:$0xff]
  %v421 = vld [vmem:[%s4 + $0x198] sm:$0xff]
  %v422 = vld [vmem:[%s4 + $0x1a0] sm:$0xff]
  %v423 = vld [vmem:[%s4 + $0x1a8] sm:$0xff]
  %v424 = vld [vmem:[%s4 + $0x1b0] sm:$0xff]
  %v425 = vld [vmem:[%s4 + $0x1b8] sm:$0xff]
  %v426 = vld [vmem:[%s4 + $0x1c0] sm:$0xff]
  %v427 = vld [vmem:[%s4 + $0x1c8] sm:$0xff]
  %v428 = vld [vmem:[%s4 + $0x1d0] sm:$0xff]
  %v429 = vld [vmem:[%s4 + $0x1d8] sm:$0xff]
  %v430 = vld [vmem:[%s4 + $0x1e0] sm:$0xff]
  %v431 = vld [vmem:[%s4 + $0x1e8] sm:$0xff]
  %v432 = vld [vmem:[%s4 + $0x1f0] sm:$0xff]
  %v433 = vld [vmem:[%s4 + $0x1f8] sm:$0xff]
  %v434 = vld [vmem:[%s4 + $0x200] sm:$0xff]
  %v435 = vld [vmem:[%s4 + $0x208] sm:$0xff]
  %v436 = vld [vmem:[%s4 + $0x210] sm:$0xff]
  %v437 = vld [vmem:[%s4 + $0x218] sm:$0xff]
  %v438 = vld [vmem:[%s4 + $0x220] sm:$0xff]
  %v439 = vld [vmem:[%s4 + $0x228] sm:$0xff]
  %v440 = vld [vmem:[%s4 + $0x230] sm:$0xff]
  %v441 = vld [vmem:[%s4 + $0x238] sm:$0xff]
  %v442 = vld [vmem:[%s4 + $0x240] sm:$0xff]
  %v443 = vld [vmem:[%s4 + $0x248] sm:$0xff]
  %v444 = vld [vmem:[%s4 + $0x250] sm:$0xff]
  %v445 = vld [vmem:[%s4 + $0x258] sm:$0xff]
  %v446 = vld [vmem:[%s4 + $0x260] sm:$0xff]
  %v447 = vld [vmem:[%s4 + $0x268] sm:$0xff]
  %v448 = vld [vmem:[%s4 + $0x270] sm:$0xff]
  %v449 = vld [vmem:[%s4 + $0x278] sm:$0xff]
  %v450 = vld [vmem:[%s4 + $0x280] sm:$0xff]
  %v451 = vld [vmem:[%s4 + $0x288] sm:$0xff]
  %v452 = vld [vmem:[%s4 + $0x290] sm:$0xff]
  %v453 = vld [vmem:[%s4 + $0x298] sm:$0xff]
  %v454 = vld [vmem:[%s4 + $0x2a0] sm:$0xff]
  %v455 = vld [vmem:[%s4 + $0x2a8] sm:$0xff]
  %v456 = vld [vmem:[%s4 + $0x2b0] sm:$0xff]
  %v457 = vld [vmem:[%s4 + $0x2b8] sm:$0xff]
  %v458 = vld [vmem:[%s4 + $0x2c0] sm:$0xff]
  %v459 = vld [vmem:[%s4 + $0x2c8] sm:$0xff]
  %v460 = vld [vmem:[%s4 + $0x2d0] sm:$0xff]
  %v461 = vld [vmem:[%s4 + $0x2d8] sm:$0xff]
  %v462 = vld [vmem:[%s4 + $0x2e0] sm:$0xff]
  %v463 = vld [vmem:[%s4 + $0x2e8] sm:$0xff]
  %v464 = vld [vmem:[%s4 + $0x2f0] sm:$0xff]
  %v465 = vld [vmem:[%s4 + $0x2f8] sm:$0xff]
  %v466 = vld [vmem:[%s4 + $0x300] sm:$0xff]
  %v467 = vld [vmem:[%s4 + $0x308] sm:$0xff]
  %v468 = vld [vmem:[%s4 + $0x310] sm:$0xff]
  %v469 = vld [vmem:[%s4 + $0x318] sm:$0xff]
  %v470 = vld [vmem:[%s4 + $0x320] sm:$0xff]
  %v471 = vld [vmem:[%s4 + $0x328] sm:$0xff]
  %v472 = vld [vmem:[%s4 + $0x330] sm:$0xff]
  %v473 = vld [vmem:[%s4 + $0x338] sm:$0xff]
  %v474 = vld [vmem:[%s4 + $0x340] sm:$0xff]
  %v475 = vld [vmem:[%s4 + $0x348] sm:$0xff]
  %v476 = vld [vmem:[%s4 + $0x350] sm:$0xff]
  %v477 = vld [vmem:[%s4 + $0x358] sm:$0xff]
  %v478 = vld [vmem:[%s4 + $0x360] sm:$0xff]
  %v479 = vld [vmem:[%s4 + $0x368] sm:$0xff]
  %v480 = vld [vmem:[%s4 + $0x370] sm:$0xff]
  %v481 = vld [vmem:[%s4 + $0x378] sm:$0xff]
  %v482 = vld [vmem:[%s4 + $0x380] sm:$0xff]
  %v483 = vld [vmem:[%s4 + $0x388] sm:$0xff]
  %v484 = vld [vmem:[%s4 + $0x390] sm:$0xff]
  %v485 = vld [vmem:[%s4 + $0x398] sm:$0xff]
  %v486 = vld [vmem:[%s4 + $0x3a0] sm:$0xff]
  %v487 = vld [vmem:[%s4 + $0x3a8] sm:$0xff]
  %v488 = vld [vmem:[%s4 + $0x3b0] sm:$0xff]
  %v489 = vld [vmem:[%s4 + $0x3b8] sm:$0xff]
  %v491 = vsel %vm36, %v249, 0
  %493 = vmatpush.msra.mxu0 0.0
  %494 = vmatpush.msra.mxu0 %v482
  %495 = vmatpush.msra.mxu0 %v474
  %496 = vmatpush.msra.mxu0 %v466
  %497 = vmatpush.msra.mxu0 %v458
  %498 = vmatpush.msra.mxu0 %v450
  %499 = vmatpush.msra.mxu0 %v442
  %500 = vmatpush.msra.mxu0 %v434
  %501 = vmatpush.msra.mxu0 %v426
  %502 = vmatpush.msra.mxu0 %v418
  %503 = vmatpush.msra.mxu0 %v410
  %504 = vmatpush.msra.mxu0 %v402
  %505 = vmatpush.msra.mxu0 %v394
  %506 = vmatpush.msra.mxu0 %v386
  %507 = vmatpush.msra.mxu0 %v378
  %508 = vmatpush.msra.mxu0 %v370
  %509 = vmatmul.f32.gmra.mxu0 %v491
  %v510 = vpop.f32.mrf.mxu0
  %v511 = vadd.f32 0.0, %v510
  %512 = vdwg.mxu0
  %513 = vmatpush.msra.mxu0 0.0
  %514 = vmatpush.msra.mxu0 %v483
  %515 = vmatpush.msra.mxu0 %v475
  %516 = vmatpush.msra.mxu0 %v467
  %517 = vmatpush.msra.mxu0 %v459
  %518 = vmatpush.msra.mxu0 %v451
  %519 = vmatpush.msra.mxu0 %v443
  %520 = vmatpush.msra.mxu0 %v435
  %521 = vmatpush.msra.mxu0 %v427
  %522 = vmatpush.msra.mxu0 %v419
  %523 = vmatpush.msra.mxu0 %v411
  %524 = vmatpush.msra.mxu0 %v403
  %525 = vmatpush.msra.mxu0 %v395
  %526 = vmatpush.msra.mxu0 %v387
  %527 = vmatpush.msra.mxu0 %v379
  %528 = vmatpush.msra.mxu0 %v371
  %529 = vmatmul.f32.gmra.mxu0 %v491
  %v530 = vpop.f32.mrf.mxu0
  %v531 = vadd.f32 0.0, %v530
  %532 = vdwg.mxu0
  %533 = vmatpush.msra.mxu0 0.0
  %534 = vmatpush.msra.mxu0 %v484
  %535 = vmatpush.msra.mxu0 %v476
  %536 = vmatpush.msra.mxu0 %v468
  %537 = vmatpush.msra.mxu0 %v460
  %538 = vmatpush.msra.mxu0 %v452
  %539 = vmatpush.msra.mxu0 %v444
  %540 = vmatpush.msra.mxu0 %v436
  %541 = vmatpush.msra.mxu0 %v428
  %542 = vmatpush.msra.mxu0 %v420
  %543 = vmatpush.msra.mxu0 %v412
  %544 = vmatpush.msra.mxu0 %v404
  %545 = vmatpush.msra.mxu0 %v396
  %546 = vmatpush.msra.mxu0 %v388
  %547 = vmatpush.msra.mxu0 %v380
  %548 = vmatpush.msra.mxu0 %v372
  %549 = vmatmul.f32.gmra.mxu0 %v491
  %v550 = vpop.f32.mrf.mxu0
  %v551 = vadd.f32 0.0, %v550
  %552 = vdwg.mxu0
  %553 = vmatpush.msra.mxu0 0.0
  %554 = vmatpush.msra.mxu0 %v485
  %555 = vmatpush.msra.mxu0 %v477
  %556 = vmatpush.msra.mxu0 %v469
  %557 = vmatpush.msra.mxu0 %v461
  %558 = vmatpush.msra.mxu0 %v453
  %559 = vmatpush.msra.mxu0 %v445
  %560 = vmatpush.msra.mxu0 %v437
  %561 = vmatpush.msra.mxu0 %v429
  %562 = vmatpush.msra.mxu0 %v421
  %563 = vmatpush.msra.mxu0 %v413
  %564 = vmatpush.msra.mxu0 %v405
  %565 = vmatpush.msra.mxu0 %v397
  %566 = vmatpush.msra.mxu0 %v389
  %567 = vmatpush.msra.mxu0 %v381
  %568 = vmatpush.msra.mxu0 %v373
  %569 = vmatmul.f32.gmra.mxu0 %v491
  %v570 = vpop.f32.mrf.mxu0
  %v571 = vadd.f32 0.0, %v570
  %572 = vdwg.mxu0
  %573 = vmatpush.msra.mxu0 0.0
  %574 = vmatpush.msra.mxu0 %v486
  %575 = vmatpush.msra.mxu0 %v478
  %576 = vmatpush.msra.mxu0 %v470
  %577 = vmatpush.msra.mxu0 %v462
  %578 = vmatpush.msra.mxu0 %v454
  %579 = vmatpush.msra.mxu0 %v446
  %580 = vmatpush.msra.mxu0 %v438
  %581 = vmatpush.msra.mxu0 %v430
  %582 = vmatpush.msra.mxu0 %v422
  %583 = vmatpush.msra.mxu0 %v414
  %584 = vmatpush.msra.mxu0 %v406
  %585 = vmatpush.msra.mxu0 %v398
  %586 = vmatpush.msra.mxu0 %v390
  %587 = vmatpush.msra.mxu0 %v382
  %588 = vmatpush.msra.mxu0 %v374
  %589 = vmatmul.f32.gmra.mxu0 %v491
  %v590 = vpop.f32.mrf.mxu0
  %v591 = vadd.f32 0.0, %v590
  %592 = vdwg.mxu0
  %593 = vmatpush.msra.mxu0 0.0
  %594 = vmatpush.msra.mxu0 %v487
  %595 = vmatpush.msra.mxu0 %v479
  %596 = vmatpush.msra.mxu0 %v471
  %597 = vmatpush.msra.mxu0 %v463
  %598 = vmatpush.msra.mxu0 %v455
  %599 = vmatpush.msra.mxu0 %v447
  %600 = vmatpush.msra.mxu0 %v439
  %601 = vmatpush.msra.mxu0 %v431
  %602 = vmatpush.msra.mxu0 %v423
  %603 = vmatpush.msra.mxu0 %v415
  %604 = vmatpush.msra.mxu0 %v407
  %605 = vmatpush.msra.mxu0 %v399
  %606 = vmatpush.msra.mxu0 %v391
  %607 = vmatpush.msra.mxu0 %v383
  %608 = vmatpush.msra.mxu0 %v375
  %609 = vmatmul.f32.gmra.mxu0 %v491
  %v610 = vpop.f32.mrf.mxu0
  %v611 = vadd.f32 0.0, %v610
  %612 = vdwg.mxu0
  %613 = vmatpush.msra.mxu0 0.0
  %614 = vmatpush.msra.mxu0 %v488
  %615 = vmatpush.msra.mxu0 %v480
  %616 = vmatpush.msra.mxu0 %v472
  %617 = vmatpush.msra.mxu0 %v464
  %618 = vmatpush.msra.mxu0 %v456
  %619 = vmatpush.msra.mxu0 %v448
  %620 = vmatpush.msra.mxu0 %v440
  %621 = vmatpush.msra.mxu0 %v432
  %622 = vmatpush.msra.mxu0 %v424
  %623 = vmatpush.msra.mxu0 %v416
  %624 = vmatpush.msra.mxu0 %v408
  %625 = vmatpush.msra.mxu0 %v400
  %626 = vmatpush.msra.mxu0 %v392
  %627 = vmatpush.msra.mxu0 %v384
  %628 = vmatpush.msra.mxu0 %v376
  %629 = vmatmul.f32.gmra.mxu0 %v491
  %v630 = vpop.f32.mrf.mxu0
  %v631 = vadd.f32 0.0, %v630
  %632 = vdwg.mxu0
  %633 = vmatpush.msra.mxu0 0.0
  %634 = vmatpush.msra.mxu0 %v489
  %635 = vmatpush.msra.mxu0 %v481
  %636 = vmatpush.msra.mxu0 %v473
  %637 = vmatpush.msra.mxu0 %v465
  %638 = vmatpush.msra.mxu0 %v457
  %639 = vmatpush.msra.mxu0 %v449
  %640 = vmatpush.msra.mxu0 %v441
  %641 = vmatpush.msra.mxu0 %v433
  %642 = vmatpush.msra.mxu0 %v425
  %643 = vmatpush.msra.mxu0 %v417
  %644 = vmatpush.msra.mxu0 %v409
  %645 = vmatpush.msra.mxu0 %v401
  %646 = vmatpush.msra.mxu0 %v393
  %647 = vmatpush.msra.mxu0 %v385
  %648 = vmatpush.msra.mxu0 %v377
  %649 = vmatmul.f32.gmra.mxu0 %v491
  %v650 = vpop.f32.mrf.mxu0
  %v651 = vadd.f32 0.0, %v650
  %652 = vdwg.mxu0
  %v654 = vsel %vm36, %v58, 0
  %656 = vmatpush.msra.mxu0 0.0
  %657 = vmatpush.msra.mxu0 %v362
  %658 = vmatpush.msra.mxu0 %v354
  %659 = vmatpush.msra.mxu0 %v346
  %660 = vmatpush.msra.mxu0 %v338
  %661 = vmatpush.msra.mxu0 %v330
  %662 = vmatpush.msra.mxu0 %v322
  %663 = vmatpush.msra.mxu0 %v314
  %664 = vmatpush.msra.mxu0 %v306
  %665 = vmatpush.msra.mxu0 %v298
  %666 = vmatpush.msra.mxu0 %v290
  %667 = vmatpush.msra.mxu0 %v282
  %668 = vmatpush.msra.mxu0 %v274
  %669 = vmatpush.msra.mxu0 %v266
  %670 = vmatpush.msra.mxu0 %v258
  %671 = vmatpush.msra.mxu0 %v250
  %672 = vmatmul.f32.gmra.mxu0 %v654
  %v673 = vpop.f32.mrf.mxu0
  %v674 = vadd.f32 %v511, %v673
  %675 = vdwg.mxu0
  %676 = vmatpush.msra.mxu0 0.0
  %677 = vmatpush.msra.mxu0 %v363
  %678 = vmatpush.msra.mxu0 %v355
  %679 = vmatpush.msra.mxu0 %v347
  %680 = vmatpush.msra.mxu0 %v339
  %681 = vmatpush.msra.mxu0 %v331
  %682 = vmatpush.msra.mxu0 %v323
  %683 = vmatpush.msra.mxu0 %v315
  %684 = vmatpush.msra.mxu0 %v307
  %685 = vmatpush.msra.mxu0 %v299
  %686 = vmatpush.msra.mxu0 %v291
  %687 = vmatpush.msra.mxu0 %v283
  %688 = vmatpush.msra.mxu0 %v275
  %689 = vmatpush.msra.mxu0 %v267
  %690 = vmatpush.msra.mxu0 %v259
  %691 = vmatpush.msra.mxu0 %v251
  %692 = vmatmul.f32.gmra.mxu0 %v654
  %v693 = vpop.f32.mrf.mxu0
  %v694 = vadd.f32 %v531, %v693
  %695 = vdwg.mxu0
  %696 = vmatpush.msra.mxu0 0.0
  %697 = vmatpush.msra.mxu0 %v364
  %698 = vmatpush.msra.mxu0 %v356
  %699 = vmatpush.msra.mxu0 %v348
  %700 = vmatpush.msra.mxu0 %v340
  %701 = vmatpush.msra.mxu0 %v332
  %702 = vmatpush.msra.mxu0 %v324
  %703 = vmatpush.msra.mxu0 %v316
  %704 = vmatpush.msra.mxu0 %v308
  %705 = vmatpush.msra.mxu0 %v300
  %706 = vmatpush.msra.mxu0 %v292
  %707 = vmatpush.msra.mxu0 %v284
  %708 = vmatpush.msra.mxu0 %v276
  %709 = vmatpush.msra.mxu0 %v268
  %710 = vmatpush.msra.mxu0 %v260
  %711 = vmatpush.msra.mxu0 %v252
  %712 = vmatmul.f32.gmra.mxu0 %v654
  %v713 = vpop.f32.mrf.mxu0
  %v714 = vadd.f32 %v551, %v713
  %715 = vdwg.mxu0
  %716 = vmatpush.msra.mxu0 0.0
  %717 = vmatpush.msra.mxu0 %v365
  %718 = vmatpush.msra.mxu0 %v357
  %719 = vmatpush.msra.mxu0 %v349
  %720 = vmatpush.msra.mxu0 %v341
  %721 = vmatpush.msra.mxu0 %v333
  %722 = vmatpush.msra.mxu0 %v325
  %723 = vmatpush.msra.mxu0 %v317
  %724 = vmatpush.msra.mxu0 %v309
  %725 = vmatpush.msra.mxu0 %v301
  %726 = vmatpush.msra.mxu0 %v293
  %727 = vmatpush.msra.mxu0 %v285
  %728 = vmatpush.msra.mxu0 %v277
  %729 = vmatpush.msra.mxu0 %v269
  %730 = vmatpush.msra.mxu0 %v261
  %731 = vmatpush.msra.mxu0 %v253
  %732 = vmatmul.f32.gmra.mxu0 %v654
  %v733 = vpop.f32.mrf.mxu0
  %v734 = vadd.f32 %v571, %v733
  %735 = vdwg.mxu0
  %736 = vmatpush.msra.mxu0 0.0
  %737 = vmatpush.msra.mxu0 %v366
  %738 = vmatpush.msra.mxu0 %v358
  %739 = vmatpush.msra.mxu0 %v350
  %740 = vmatpush.msra.mxu0 %v342
  %741 = vmatpush.msra.mxu0 %v334
  %742 = vmatpush.msra.mxu0 %v326
  %743 = vmatpush.msra.mxu0 %v318
  %744 = vmatpush.msra.mxu0 %v310
  %745 = vmatpush.msra.mxu0 %v302
  %746 = vmatpush.msra.mxu0 %v294
  %747 = vmatpush.msra.mxu0 %v286
  %748 = vmatpush.msra.mxu0 %v278
  %749 = vmatpush.msra.mxu0 %v270
  %750 = vmatpush.msra.mxu0 %v262
  %751 = vmatpush.msra.mxu0 %v254
  %752 = vmatmul.f32.gmra.mxu0 %v654
  %v753 = vpop.f32.mrf.mxu0
  %v754 = vadd.f32 %v591, %v753
  %755 = vdwg.mxu0
  %756 = vmatpush.msra.mxu0 0.0
  %757 = vmatpush.msra.mxu0 %v367
  %758 = vmatpush.msra.mxu0 %v359
  %759 = vmatpush.msra.mxu0 %v351
  %760 = vmatpush.msra.mxu0 %v343
  %761 = vmatpush.msra.mxu0 %v335
  %762 = vmatpush.msra.mxu0 %v327
  %763 = vmatpush.msra.mxu0 %v319
  %764 = vmatpush.msra.mxu0 %v311
  %765 = vmatpush.msra.mxu0 %v303
  %766 = vmatpush.msra.mxu0 %v295
  %767 = vmatpush.msra.mxu0 %v287
  %768 = vmatpush.msra.mxu0 %v279
  %769 = vmatpush.msra.mxu0 %v271
  %770 = vmatpush.msra.mxu0 %v263
  %771 = vmatpush.msra.mxu0 %v255
  %772 = vmatmul.f32.gmra.mxu0 %v654
  %v773 = vpop.f32.mrf.mxu0
  %v774 = vadd.f32 %v611, %v773
  %775 = vdwg.mxu0
  %776 = vmatpush.msra.mxu0 0.0
  %777 = vmatpush.msra.mxu0 %v368
  %778 = vmatpush.msra.mxu0 %v360
  %779 = vmatpush.msra.mxu0 %v352
  %780 = vmatpush.msra.mxu0 %v344
  %781 = vmatpush.msra.mxu0 %v336
  %782 = vmatpush.msra.mxu0 %v328
  %783 = vmatpush.msra.mxu0 %v320
  %784 = vmatpush.msra.mxu0 %v312
  %785 = vmatpush.msra.mxu0 %v304
  %786 = vmatpush.msra.mxu0 %v296
  %787 = vmatpush.msra.mxu0 %v288
  %788 = vmatpush.msra.mxu0 %v280
  %789 = vmatpush.msra.mxu0 %v272
  %790 = vmatpush.msra.mxu0 %v264
  %791 = vmatpush.msra.mxu0 %v256
  %792 = vmatmul.f32.gmra.mxu0 %v654
  %v793 = vpop.f32.mrf.mxu0
  %v794 = vadd.f32 %v631, %v793
  %795 = vdwg.mxu0
  %796 = vmatpush.msra.mxu0 0.0
  %797 = vmatpush.msra.mxu0 %v369
  %798 = vmatpush.msra.mxu0 %v361
  %799 = vmatpush.msra.mxu0 %v353
  %800 = vmatpush.msra.mxu0 %v345
  %801 = vmatpush.msra.mxu0 %v337
  %802 = vmatpush.msra.mxu0 %v329
  %803 = vmatpush.msra.mxu0 %v321
  %804 = vmatpush.msra.mxu0 %v313
  %805 = vmatpush.msra.mxu0 %v305
  %806 = vmatpush.msra.mxu0 %v297
  %807 = vmatpush.msra.mxu0 %v289
  %808 = vmatpush.msra.mxu0 %v281
  %809 = vmatpush.msra.mxu0 %v273
  %810 = vmatpush.msra.mxu0 %v265
  %811 = vmatpush.msra.mxu0 %v257
  %812 = vmatmul.f32.gmra.mxu0 %v654
  %v813 = vpop.f32.mrf.mxu0
  %v814 = vadd.f32 %v651, %v813
  %815 = vdwg.mxu0
  %816 = vst [vmem:[%s5] sm:$0xff] %v674
  %817 = vst [vmem:[%s5 + $0x8] sm:$0xff] %v694
  %818 = vst [vmem:[%s5 + $0x10] sm:$0xff] %v714
  %819 = vst [vmem:[%s5 + $0x18] sm:$0xff] %v734
  %820 = vst [vmem:[%s5 + $0x20] sm:$0xff] %v754
  %821 = vst [vmem:[%s5 + $0x28] sm:$0xff] %v774
  %822 = vst [vmem:[%s5 + $0x30] sm:$0xff] %v794
  %vm823 = vcmask 523264
  %824 = vst.msk [vmem:[%s5 + $0x38] sm:$0xff] %vm823, %v814
  // Predicated region
  $region22: #{time2vector_forward.1} parent=0 // pred_check
    _
  $region23: #{time2vector_forward.1} parent=0 // pred_check_branch
    %826 = sbr.rel (0) target = $region25
  $region24: #{time2vector_forward.1} parent=0 // pred_region
    _
  $region25: #{time2vector_forward.1} parent=0 // pred_fallthru
    _
  // Predicated region
  $region26: #{time2vector_forward.1} parent=0 // pred_check
    _
  $region27: #{time2vector_forward.1} parent=0 // pred_check_branch
    %828 = sbr.rel (0) target = $region29
  $region28: #{time2vector_forward.1} parent=0 // pred_region
    _
  $region29: #{time2vector_forward.1} parent=0 // pred_fallthru
    _

</llo_original>
